<compile_context>
chip_gen: v5e
topology: v5e:2x2
jax: 0.10.0
libtpu: 0.0.40
codegen_flags: <defaults>
</compile_context>

<pallas_src>
import functools

import jax
import jax.numpy as jnp
from jax.experimental import pallas as pl
from jax.experimental.pallas import tpu as pltpu


def _erf(x):
    # Abramowitz & Stegun 7.1.26, |error| < 1.5e-7. Only add/mul/div/exp/select.
    a1, a2, a3, a4, a5 = 0.254829592, -0.284496736, 1.421413741, -1.453152027, 1.061405429
    p = 0.3275911
    ax = jnp.abs(x)
    t = 1.0 / (1.0 + p * ax)
    poly = ((((a5 * t + a4) * t + a3) * t + a2) * t + a1) * t
    y = 1.0 - poly * jnp.exp(-ax * ax)
    return jnp.where(x >= 0.0, y, -y)


def _gelu_exact(x):
    # torch nn.GELU default (erf form), not the tanh approximation.
    return 0.5 * x * (1.0 + _erf(x * 0.7071067811865476))


def _ffn_kernel(x_ref, w1_ref, b1_ref, w2_ref, b2_ref, o_ref, *, compute_dtype):
    x = x_ref[...]
    w1 = w1_ref[...]
    w2 = w2_ref[...]
    if compute_dtype != jnp.float32:
        x = x.astype(compute_dtype)
        w1 = w1.astype(compute_dtype)
    # Linear 1 (MXU, f32 accumulate) + bias broadcast.
    h = jnp.dot(x, w1, preferred_element_type=jnp.float32) + b1_ref[...]
    # GELU stays in f32 (v5e VPU/EUP have no bf16); hidden never leaves VMEM.
    h = _gelu_exact(h)
    if compute_dtype != jnp.float32:
        h = h.astype(compute_dtype)
        w2 = w2.astype(compute_dtype)
    # Linear 2 (MXU, f32 accumulate) + bias broadcast.
    y = jnp.dot(h, w2, preferred_element_type=jnp.float32) + b2_ref[...]
    o_ref[...] = y.astype(o_ref.dtype)


def _round_up(x, m):
    return (x + m - 1) // m * m


def feedforward(x, w1, b1, w2, b2, *, block_m=256, compute_dtype=jnp.float32):
    """y = GELU(x @ w1 + b1) @ w2 + b2, applied over the last axis of x."""
    *lead, dim = x.shape
    hidden = w1.shape[1]
    assert w1.shape == (dim, hidden), w1.shape
    assert w2.shape == (hidden, dim), w2.shape

    x2d = x.reshape(-1, dim)
    m = x2d.shape[0]

    # Row tile: multiple of 8 (sublane), capped by block_m; pad rows if needed.
    tm = min(block_m, _round_up(m, 8))
    m_pad = _round_up(m, tm)
    if m_pad != m:
        x2d = jnp.pad(x2d, ((0, m_pad - m), (0, 0)))

    grid = (m_pad // tm,)

    out2d = pl.pallas_call(
        functools.partial(_ffn_kernel, compute_dtype=compute_dtype),
        out_shape=jax.ShapeDtypeStruct((m_pad, dim), x.dtype),
        grid=grid,
        in_specs=[
            pl.BlockSpec((tm, dim), lambda i: (i, 0)),        # x row tile (pipelined)
            pl.BlockSpec((dim, hidden), lambda i: (0, 0)),    # w1 (VMEM-resident)
            pl.BlockSpec((1, hidden), lambda i: (0, 0)),      # b1 (resident)
            pl.BlockSpec((hidden, dim), lambda i: (0, 0)),    # w2 (resident)
            pl.BlockSpec((1, dim), lambda i: (0, 0)),         # b2 (resident)
        ],
        out_specs=pl.BlockSpec((tm, dim), lambda i: (i, 0)),
        compiler_params=pltpu.CompilerParams(
            dimension_semantics=("parallel",),                # v7x: shard rows over 2 TCs
        ),
    )(x2d, w1, b1.reshape(1, hidden), w2, b2.reshape(1, dim))

    return out2d[:m].reshape(*lead, dim)


if __name__ == "__main__":
    B, S, dim, hidden = 2, 16, 128, 256
    key = jax.random.PRNGKey(0)
    kx, k1, k2, k3, k4 = jax.random.split(key, 5)

    x = jax.random.normal(kx, (B, S, dim), jnp.float32)
    # torch nn.Linear default init: U(-1/sqrt(fan_in), 1/sqrt(fan_in))
    lim1 = 1.0 / float(jnp.sqrt(dim))
    lim2 = 1.0 / float(jnp.sqrt(hidden))
    w1 = jax.random.uniform(k1, (dim, hidden), jnp.float32, -lim1, lim1)
    b1 = jax.random.uniform(k2, (hidden,), jnp.float32, -lim1, lim1)
    w2 = jax.random.uniform(k3, (hidden, dim), jnp.float32, -lim2, lim2)
    b2 = jax.random.uniform(k4, (dim,), jnp.float32, -lim2, lim2)

    y = jax.jit(feedforward)(x, w1, b1, w2, b2)
    jax.block_until_ready(y)
    assert y.shape == (B, S, dim), y.shape
    assert bool(jnp.all(jnp.isfinite(y)))

    # Plain-JAX reference (exact-erf GELU), loose tolerance to absorb any
    # MXU-vs-XLA f32 matmul precision differences.
    h_ref = jnp.einsum("bsd,dh->bsh", x, w1, precision=jax.lax.Precision.HIGHEST) + b1
    h_ref = 0.5 * h_ref * (1.0 + jax.scipy.special.erf(h_ref / jnp.sqrt(2.0)))
    y_ref = jnp.einsum("bsh,hd->bsd", h_ref, w2, precision=jax.lax.Precision.HIGHEST) + b2
    assert jnp.allclose(y, y_ref, atol=1e-2, rtol=1e-2), float(jnp.max(jnp.abs(y - y_ref)))

    print("KERNEL_OK")
</pallas_src>

<mosaic_0001>
module attributes {stable_mosaic.version = 11 : i64} {
  func.func @_ffn_kernel(%arg0: i32, %arg1: memref<32x128xf32, #tpu.memory_space<vmem>>, %arg2: memref<128x256xf32, #tpu.memory_space<vmem>>, %arg3: memref<1x256xf32, #tpu.memory_space<vmem>>, %arg4: memref<256x128xf32, #tpu.memory_space<vmem>>, %arg5: memref<1x128xf32, #tpu.memory_space<vmem>>, %arg6: memref<32x128xf32, #tpu.memory_space<vmem>>) attributes {dimension_semantics = [#tpu.dimension_semantics<parallel>], iteration_bounds = array<i64: 1>, scalar_prefetch = 0 : i64, scratch_operands = 0 : i64, tpu.core_type = #tpu.core_type<tc>, window_params = [{transform_indices = @transform_0, window_bounds = array<i64: 32, 128>}, {pipeline_mode = #tpu.pipeline_mode<synchronous>, transform_indices = @transform_1, window_bounds = array<i64: 128, 256>}, {pipeline_mode = #tpu.pipeline_mode<synchronous>, transform_indices = @transform_2, window_bounds = array<i64: 1, 256>}, {pipeline_mode = #tpu.pipeline_mode<synchronous>, transform_indices = @transform_3, window_bounds = array<i64: 256, 128>}, {pipeline_mode = #tpu.pipeline_mode<synchronous>, transform_indices = @transform_4, window_bounds = array<i64: 1, 128>}, {transform_indices = @transform_5, window_bounds = array<i64: 32, 128>}]} {
    %c0 = arith.constant 0 : index
    %c0_0 = arith.constant 0 : index
    %0 = vector.load %arg1[%c0, %c0_0] : memref<32x128xf32, #tpu.memory_space<vmem>>, vector<32x128xf32>
    %c0_1 = arith.constant 0 : index
    %c0_2 = arith.constant 0 : index
    %1 = vector.load %arg2[%c0_1, %c0_2] : memref<128x256xf32, #tpu.memory_space<vmem>>, vector<128x256xf32>
    %c0_3 = arith.constant 0 : index
    %c0_4 = arith.constant 0 : index
    %2 = vector.load %arg4[%c0_3, %c0_4] : memref<256x128xf32, #tpu.memory_space<vmem>>, vector<256x128xf32>
    %cst = arith.constant dense<0.000000e+00> : vector<32x256xf32>
    %3 = tpu.matmul %0, %1, %cst {dimension_numbers = #tpu.dot_dimension_numbers<[1], [0], [0], [1], [0, 0, 1, 1], [], []>} : vector<32x128xf32>, vector<128x256xf32>, vector<32x256xf32> -> vector<32x256xf32>
    %c0_5 = arith.constant 0 : index
    %c0_6 = arith.constant 0 : index
    %4 = vector.load %arg3[%c0_5, %c0_6] : memref<1x256xf32, #tpu.memory_space<vmem>>, vector<1x256xf32>
    %5 = vector.broadcast %4 : vector<1x256xf32> to vector<32x256xf32>
    %6 = arith.addf %3, %5 : vector<32x256xf32>
    %cst_7 = arith.constant 5.000000e-01 : f32
    %7 = vector.broadcast %cst_7 : f32 to vector<32x256xf32>
    %8 = arith.mulf %7, %6 : vector<32x256xf32>
    %cst_8 = arith.constant 0.707106769 : f32
    %9 = vector.broadcast %cst_8 : f32 to vector<32x256xf32>
    %10 = arith.mulf %6, %9 : vector<32x256xf32>
    %11 = math.absf %10 : vector<32x256xf32>
    %cst_9 = arith.constant 0.327591091 : f32
    %12 = vector.broadcast %cst_9 : f32 to vector<32x256xf32>
    %13 = arith.mulf %12, %11 : vector<32x256xf32>
    %cst_10 = arith.constant 1.000000e+00 : f32
    %14 = vector.broadcast %cst_10 : f32 to vector<32x256xf32>
    %15 = arith.addf %14, %13 : vector<32x256xf32>
    %cst_11 = arith.constant 1.000000e+00 : f32
    %16 = vector.broadcast %cst_11 : f32 to vector<32x256xf32>
    %17 = arith.divf %16, %15 : vector<32x256xf32>
    %cst_12 = arith.constant 1.06140542 : f32
    %18 = vector.broadcast %cst_12 : f32 to vector<32x256xf32>
    %19 = arith.mulf %18, %17 : vector<32x256xf32>
    %cst_13 = arith.constant -1.45315206 : f32
    %20 = vector.broadcast %cst_13 : f32 to vector<32x256xf32>
    %21 = arith.addf %19, %20 : vector<32x256xf32>
    %22 = arith.mulf %21, %17 : vector<32x256xf32>
    %cst_14 = arith.constant 1.42141378 : f32
    %23 = vector.broadcast %cst_14 : f32 to vector<32x256xf32>
    %24 = arith.addf %22, %23 : vector<32x256xf32>
    %25 = arith.mulf %24, %17 : vector<32x256xf32>
    %cst_15 = arith.constant -0.284496725 : f32
    %26 = vector.broadcast %cst_15 : f32 to vector<32x256xf32>
    %27 = arith.addf %25, %26 : vector<32x256xf32>
    %28 = arith.mulf %27, %17 : vector<32x256xf32>
    %cst_16 = arith.constant 0.254829586 : f32
    %29 = vector.broadcast %cst_16 : f32 to vector<32x256xf32>
    %30 = arith.addf %28, %29 : vector<32x256xf32>
    %31 = arith.mulf %30, %17 : vector<32x256xf32>
    %cst_17 = arith.constant 0.000000e+00 : f32
    %32 = vector.broadcast %cst_17 : f32 to vector<32x256xf32>
    %33 = arith.subf %32, %11 : vector<32x256xf32>
    %34 = arith.mulf %33, %11 : vector<32x256xf32>
    %35 = math.exp %34 : vector<32x256xf32>
    %36 = arith.mulf %31, %35 : vector<32x256xf32>
    %cst_18 = arith.constant 1.000000e+00 : f32
    %37 = vector.broadcast %cst_18 : f32 to vector<32x256xf32>
    %38 = arith.subf %37, %36 : vector<32x256xf32>
    %cst_19 = arith.constant 0.000000e+00 : f32
    %39 = vector.broadcast %cst_19 : f32 to vector<32x256xf32>
    %40 = arith.cmpf oge, %10, %39 : vector<32x256xf32>
    %cst_20 = arith.constant 0.000000e+00 : f32
    %41 = vector.broadcast %cst_20 : f32 to vector<32x256xf32>
    %42 = arith.subf %41, %38 : vector<32x256xf32>
    %43 = arith.select %40, %38, %42 : vector<32x256xi1>, vector<32x256xf32>
    %cst_21 = arith.constant 1.000000e+00 : f32
    %44 = vector.broadcast %cst_21 : f32 to vector<32x256xf32>
    %45 = arith.addf %44, %43 : vector<32x256xf32>
    %46 = arith.mulf %8, %45 : vector<32x256xf32>
    %cst_22 = arith.constant dense<0.000000e+00> : vector<32x128xf32>
    %47 = tpu.matmul %46, %2, %cst_22 {dimension_numbers = #tpu.dot_dimension_numbers<[1], [0], [0], [1], [0, 0, 1, 1], [], []>} : vector<32x256xf32>, vector<256x128xf32>, vector<32x128xf32> -> vector<32x128xf32>
    %c0_23 = arith.constant 0 : index
    %c0_24 = arith.constant 0 : index
    %48 = vector.load %arg5[%c0_23, %c0_24] : memref<1x128xf32, #tpu.memory_space<vmem>>, vector<1x128xf32>
    %49 = vector.broadcast %48 : vector<1x128xf32> to vector<32x128xf32>
    %50 = arith.addf %47, %49 : vector<32x128xf32>
    %c0_25 = arith.constant 0 : index
    %c0_26 = arith.constant 0 : index
    %51 = vector.load %arg6[%c0_25, %c0_26] : memref<32x128xf32, #tpu.memory_space<vmem>>, vector<32x128xf32>
    tpu.vector_store %arg6[%c0_25, %c0_26], %50 {strides = array<i32>} : memref<32x128xf32, #tpu.memory_space<vmem>>, vector<32x128xf32>,
    return
  }
  func.func @transform_0(%arg0: i32) -> (i32, i32) {
    %c0_i32 = arith.constant 0 : i32
    %c0_i32_0 = arith.constant 0 : i32
    return %arg0, %c0_i32 : i32, i32
  }
  func.func @transform_1(%arg0: i32) -> (i32, i32) {
    %c0_i32 = arith.constant 0 : i32
    %c0_i32_0 = arith.constant 0 : i32
    %c0_i32_1 = arith.constant 0 : i32
    return %c0_i32, %c0_i32_0 : i32, i32
  }
  func.func @transform_2(%arg0: i32) -> (i32, i32) {
    %c0_i32 = arith.constant 0 : i32
    %c0_i32_0 = arith.constant 0 : i32
    %c0_i32_1 = arith.constant 0 : i32
    return %c0_i32, %c0_i32_0 : i32, i32
  }
  func.func @transform_3(%arg0: i32) -> (i32, i32) {
    %c0_i32 = arith.constant 0 : i32
    %c0_i32_0 = arith.constant 0 : i32
    %c0_i32_1 = arith.constant 0 : i32
    return %c0_i32, %c0_i32_0 : i32, i32
  }
  func.func @transform_4(%arg0: i32) -> (i32, i32) {
    %c0_i32 = arith.constant 0 : i32
    %c0_i32_0 = arith.constant 0 : i32
    %c0_i32_1 = arith.constant 0 : i32
    return %c0_i32, %c0_i32_0 : i32, i32
  }
  func.func @transform_5(%arg0: i32) -> (i32, i32) {
    %c0_i32 = arith.constant 0 : i32
    %c0_i32_0 = arith.constant 0 : i32
    return %arg0, %c0_i32 : i32, i32
  }
}

</mosaic_0001>

<llo_original>
// kernel: feedforward.1
$region0: #{feedforward.1}
  #allocation0 [shape = 'u32[]', space=smem, size = 0x4, offset = 0x4, fixed_abs, tag = 'smem constant byte address 0x4 - core index']
  #allocation1 [shape = 'u32[72,128]{1,0:T(1,128)}', space=vmem, size = 0x9000, scoped, tag = 'internal scratch']
  %s0 = inlined_call_operand.hbm [shape: f32[32,128], index: 0, kind: input, shape index: {}]
  %s1 = inlined_call_operand.hbm [shape: f32[128,256], index: 1, kind: input, shape index: {}]
  %s2 = inlined_call_operand.vmem [shape: f32[1,256], index: 2, kind: input, shape index: {}]
  %s3 = inlined_call_operand.hbm [shape: f32[256,128], index: 3, kind: input, shape index: {}]
  %s4 = inlined_call_operand.vmem [shape: f32[1,128], index: 4, kind: input, shape index: {}]
  %s5 = inlined_call_operand.hbm [shape: f32[32,128], index: 5, kind: output, shape index: {}]
  %s6 = sld [smem:[#allocation0]]
  $region42: #{feedforward.1} parent=0
    _
  %s8 = ssub.s32 1, %s6
  %s9 = scalar_select 0, %s8, %s6
  $region1: #{feedforward.1} parent=0
    #allocation2 [shape = 'u8[16384]{0}', space=vmem, size = 0x4000, scoped, tag = 'input window, operand 0, single buffered']
    #allocation3 [shape = 's32[1]{0}', space=sflag, size = 0x4, scoped, tag = 'scoped memory for feedforward.1']
    #allocation4 [shape = 's32[1]{0}', space=sflag, size = 0x4, scoped, tag = 'scoped memory for feedforward.1']
    #allocation5 [shape = 'u8[131072]{0}', space=vmem, size = 0x20000, scoped, tag = 'input window, operand 1, single buffered']
    #allocation6 [shape = 's32[1]{0}', space=sflag, size = 0x4, scoped, tag = 'scoped memory for feedforward.1']
    #allocation7 [shape = 'u8[131072]{0}', space=vmem, size = 0x20000, scoped, tag = 'input window, operand 3, single buffered']
    #allocation8 [shape = 'u8[16384]{0}', space=vmem, size = 0x4000, scoped, tag = 'output window, operand 0, single buffered']
    %10 = vsyncpa [#allocation3], 0
    %11 = vsyncpa [#allocation6], 0
    %12 = vsyncpa [#allocation4], 0
    // Predicated region
    $region2: #{feedforward.1} parent=1 // pred_check
      _
    $region3: #{feedforward.1} parent=1 // pred_check_branch
      %14 = sbr.rel (0) target = $region5
    $region4: #{feedforward.1} parent=1 // pred_region
      %16 = vsyncadd [#allocation3], 0
      %s17 = sshll.u32 %s0, 4
      %s18 = int_to_ptr.hbm [resolvable:$true] %s17
      %s19 = sshll.u32 [#allocation2], 4
      %s20 = int_to_ptr.vmem [resolvable:$true] %s19
      %25 = dma.hbm_to_vmem [thread:$0]  %s18, 512, %s20, [#allocation3], 128, 128, 8
    $region5: #{feedforward.1} parent=1 // pred_fallthru
      _
    // Predicated region
    $region6: #{feedforward.1} parent=1 // pred_check
      _
    $region7: #{feedforward.1} parent=1 // pred_check_branch
      %27 = sbr.rel (0) target = $region9
    $region8: #{feedforward.1} parent=1 // pred_region
      %29 = vsyncadd [#allocation6], 0
      %s30 = sshll.u32 %s1, 4
      %s31 = int_to_ptr.hbm [resolvable:$true] %s30
      %s32 = sshll.u32 [#allocation5], 4
      %s33 = int_to_ptr.vmem [resolvable:$true] %s32
      %38 = dma.hbm_to_vmem [thread:$0]  %s31, 4096, %s33, [#allocation6], 256, 256, 16
    $region9: #{feedforward.1} parent=1 // pred_fallthru
      _
    // Predicated region
    $region10: #{feedforward.1} parent=1 // pred_check
      _
    $region11: #{feedforward.1} parent=1 // pred_check_branch
      %40 = sbr.rel (0) target = $region13
    $region12: #{feedforward.1} parent=1 // pred_region
      _
    $region13: #{feedforward.1} parent=1 // pred_fallthru
      _
    // Predicated region
    $region14: #{feedforward.1} parent=1 // pred_check
      _
    $region15: #{feedforward.1} parent=1 // pred_check_branch
      %42 = sbr.rel (0) target = $region17
    $region16: #{feedforward.1} parent=1 // pred_region
      %44 = vsyncadd [#allocation6], 0
      %s45 = sshll.u32 %s3, 4
      %s46 = int_to_ptr.hbm [resolvable:$true] %s45
      %s47 = sshll.u32 [#allocation7], 4
      %s48 = int_to_ptr.vmem [resolvable:$true] %s47
      %53 = dma.hbm_to_vmem [thread:$0]  %s46, 4096, %s48, [#allocation6], 128, 128, 8
    $region17: #{feedforward.1} parent=1 // pred_fallthru
      _
    // Predicated region
    $region18: #{feedforward.1} parent=1 // pred_check
      _
    $region19: #{feedforward.1} parent=1 // pred_check_branch
      %55 = sbr.rel (0) target = $region21
    $region20: #{feedforward.1} parent=1 // pred_region
      _
    $region21: #{feedforward.1} parent=1 // pred_fallthru
      _
    // Predicated region
    $region22: #{feedforward.1} parent=1 // pred_check
      _
    $region23: #{feedforward.1} parent=1 // pred_check_branch
      %57 = sbr.rel (0) target = $region25
    $region24: #{feedforward.1} parent=1 // pred_region
      %59 = dma.done [#allocation3], 512
    $region25: #{feedforward.1} parent=1 // pred_fallthru
      _
    // Predicated region
    $region26: #{feedforward.1} parent=1 // pred_check
      _
    $region27: #{feedforward.1} parent=1 // pred_check_branch
      %61 = sbr.rel (0) target = $region29
    $region28: #{feedforward.1} parent=1 // pred_region
      %63 = dma.done [#allocation6], 4096
    $region29: #{feedforward.1} parent=1 // pred_fallthru
      _
    // Predicated region
    $region30: #{feedforward.1} parent=1 // pred_check
      _
    $region31: #{feedforward.1} parent=1 // pred_check_branch
      %65 = sbr.rel (0) target = $region33
    $region32: #{feedforward.1} parent=1 // pred_region
      %67 = dma.done [#allocation6], 4096
    $region33: #{feedforward.1} parent=1 // pred_fallthru
      _
    %v68 = vld [vmem:[#allocation2] sm:$0xff]
    %v69 = vld [vmem:[#allocation2 + $0x8] sm:$0xff]
    %v70 = vld [vmem:[#allocation2 + $0x10] sm:$0xff]
    %v71 = vld [vmem:[#allocation2 + $0x18] sm:$0xff]
    %v72 = vld [vmem:[#allocation5] sm:$0xff]
    %v73 = vld [vmem:[#allocation5 + $0x8] sm:$0xff]
    %v74 = vld [vmem:[#allocation5 + $0x10] sm:$0xff]
    %v75 = vld [vmem:[#allocation5 + $0x18] sm:$0xff]
    %v76 = vld [vmem:[#allocation5 + $0x20] sm:$0xff]
    %v77 = vld [vmem:[#allocation5 + $0x28] sm:$0xff]
    %v78 = vld [vmem:[#allocation5 + $0x30] sm:$0xff]
    %v79 = vld [vmem:[#allocation5 + $0x38] sm:$0xff]
    %v80 = vld [vmem:[#allocation5 + $0x40] sm:$0xff]
    %v81 = vld [vmem:[#allocation5 + $0x48] sm:$0xff]
    %v82 = vld [vmem:[#allocation5 + $0x50] sm:$0xff]
    %v83 = vld [vmem:[#allocation5 + $0x58] sm:$0xff]
    %v84 = vld [vmem:[#allocation5 + $0x60] sm:$0xff]
    %v85 = vld [vmem:[#allocation5 + $0x68] sm:$0xff]
    %v86 = vld [vmem:[#allocation5 + $0x70] sm:$0xff]
    %v87 = vld [vmem:[#allocation5 + $0x78] sm:$0xff]
    %v88 = vld [vmem:[#allocation5 + $0x80] sm:$0xff]
    %v89 = vld [vmem:[#allocation5 + $0x88] sm:$0xff]
    %v90 = vld [vmem:[#allocation5 + $0x90] sm:$0xff]
    %v91 = vld [vmem:[#allocation5 + $0x98] sm:$0xff]
    %v92 = vld [vmem:[#allocation5 + $0xa0] sm:$0xff]
    %v93 = vld [vmem:[#allocation5 + $0xa8] sm:$0xff]
    %v94 = vld [vmem:[#allocation5 + $0xb0] sm:$0xff]
    %v95 = vld [vmem:[#allocation5 + $0xb8] sm:$0xff]
    %v96 = vld [vmem:[#allocation5 + $0xc0] sm:$0xff]
    %v97 = vld [vmem:[#allocation5 + $0xc8] sm:$0xff]
    %v98 = vld [vmem:[#allocation5 + $0xd0] sm:$0xff]
    %v99 = vld [vmem:[#allocation5 + $0xd8] sm:$0xff]
    %v100 = vld [vmem:[#allocation5 + $0xe0] sm:$0xff]
    %v101 = vld [vmem:[#allocation5 + $0xe8] sm:$0xff]
    %v102 = vld [vmem:[#allocation5 + $0xf0] sm:$0xff]
    %v103 = vld [vmem:[#allocation5 + $0xf8] sm:$0xff]
    %v104 = vld [vmem:[#allocation7] sm:$0xff]
    %v105 = vld [vmem:[#allocation7 + $0x8] sm:$0xff]
    %v106 = vld [vmem:[#allocation7 + $0x10] sm:$0xff]
    %v107 = vld [vmem:[#allocation7 + $0x18] sm:$0xff]
    %v108 = vld [vmem:[#allocation7 + $0x20] sm:$0xff]
    %v109 = vld [vmem:[#allocation7 + $0x28] sm:$0xff]
    %v110 = vld [vmem:[#allocation7 + $0x30] sm:$0xff]
    %v111 = vld [vmem:[#allocation7 + $0x38] sm:$0xff]
    %v112 = vld [vmem:[#allocation7 + $0x40] sm:$0xff]
    %v113 = vld [vmem:[#allocation7 + $0x48] sm:$0xff]
    %v114 = vld [vmem:[#allocation7 + $0x50] sm:$0xff]
    %v115 = vld [vmem:[#allocation7 + $0x58] sm:$0xff]
    %v116 = vld [vmem:[#allocation7 + $0x60] sm:$0xff]
    %v117 = vld [vmem:[#allocation7 + $0x68] sm:$0xff]
    %v118 = vld [vmem:[#allocation7 + $0x70] sm:$0xff]
    %v119 = vld [vmem:[#allocation7 + $0x78] sm:$0xff]
    %v120 = vld [vmem:[#allocation7 + $0x80] sm:$0xff]
    %v121 = vld [vmem:[#allocation7 + $0x88] sm:$0xff]
    %v122 = vld [vmem:[#allocation7 + $0x90] sm:$0xff]
    %v123 = vld [vmem:[#allocation7 + $0x98] sm:$0xff]
    %v124 = vld [vmem:[#allocation7 + $0xa0] sm:$0xff]
    %v125 = vld [vmem:[#allocation7 + $0xa8] sm:$0xff]
    %v126 = vld [vmem:[#allocation7 + $0xb0] sm:$0xff]
    %v127 = vld [vmem:[#allocation7 + $0xb8] sm:$0xff]
    %v128 = vld [vmem:[#allocation7 + $0xc0] sm:$0xff]
    %v129 = vld [vmem:[#allocation7 + $0xc8] sm:$0xff]
    %v130 = vld [vmem:[#allocation7 + $0xd0] sm:$0xff]
    %v131 = vld [vmem:[#allocation7 + $0xd8] sm:$0xff]
    %v132 = vld [vmem:[#allocation7 + $0xe0] sm:$0xff]
    %v133 = vld [vmem:[#allocation7 + $0xe8] sm:$0xff]
    %v134 = vld [vmem:[#allocation7 + $0xf0] sm:$0xff]
    %v135 = vld [vmem:[#allocation7 + $0xf8] sm:$0xff]
    %v136 = vld [vmem:[%s2] sm:$0x3]
    %v138 = vperm.slane %v136, 0
    %v139 = vperm.slane %v136, 1
    %142 = vmatpush.msra.mxu0 %v102
    %143 = vmatpush.msra.mxu0 %v100
    %144 = vmatpush.msra.mxu0 %v98
    %145 = vmatpush.msra.mxu0 %v96
    %146 = vmatpush.msra.mxu0 %v94
    %147 = vmatpush.msra.mxu0 %v92
    %148 = vmatpush.msra.mxu0 %v90
    %149 = vmatpush.msra.mxu0 %v88
    %150 = vmatpush.msra.mxu0 %v86
    %151 = vmatpush.msra.mxu0 %v84
    %152 = vmatpush.msra.mxu0 %v82
    %153 = vmatpush.msra.mxu0 %v80
    %154 = vmatpush.msra.mxu0 %v78
    %155 = vmatpush.msra.mxu0 %v76
    %156 = vmatpush.msra.mxu0 %v74
    %157 = vmatpush.msra.mxu0 %v72
    %158 = vmatmul.f32.gmra.mxu0 %v68
    %v159 = vpop.f32.mrf.mxu0
    %v160 = vadd.f32 %v138, %v159
    %161 = vmatmul.f32.gmra.mxu0 %v69
    %v162 = vpop.f32.mrf.mxu0
    %v163 = vadd.f32 %v138, %v162
    %164 = vmatmul.f32.gmra.mxu0 %v70
    %v165 = vpop.f32.mrf.mxu0
    %v166 = vadd.f32 %v138, %v165
    %167 = vmatmul.f32.gmra.mxu0 %v71
    %v168 = vpop.f32.mrf.mxu0
    %v169 = vadd.f32 %v138, %v168
    %170 = vdwg.mxu0
    %171 = vmatpush.msra.mxu0 %v103
    %172 = vmatpush.msra.mxu0 %v101
    %173 = vmatpush.msra.mxu0 %v99
    %174 = vmatpush.msra.mxu0 %v97
    %175 = vmatpush.msra.mxu0 %v95
    %176 = vmatpush.msra.mxu0 %v93
    %177 = vmatpush.msra.mxu0 %v91
    %178 = vmatpush.msra.mxu0 %v89
    %179 = vmatpush.msra.mxu0 %v87
    %180 = vmatpush.msra.mxu0 %v85
    %181 = vmatpush.msra.mxu0 %v83
    %182 = vmatpush.msra.mxu0 %v81
    %183 = vmatpush.msra.mxu0 %v79
    %184 = vmatpush.msra.mxu0 %v77
    %185 = vmatpush.msra.mxu0 %v75
    %186 = vmatpush.msra.mxu0 %v73
    %187 = vmatmul.f32.gmra.mxu0 %v68
    %v188 = vpop.f32.mrf.mxu0
    %v189 = vadd.f32 %v139, %v188
    %190 = vmatmul.f32.gmra.mxu0 %v69
    %v191 = vpop.f32.mrf.mxu0
    %v192 = vadd.f32 %v139, %v191
    %193 = vmatmul.f32.gmra.mxu0 %v70
    %v194 = vpop.f32.mrf.mxu0
    %v195 = vadd.f32 %v139, %v194
    %196 = vmatmul.f32.gmra.mxu0 %v71
    %v197 = vpop.f32.mrf.mxu0
    %v198 = vadd.f32 %v139, %v197
    %199 = vdwg.mxu0
    %v200 = vmul.f32 %v160, 0.5
    %v201 = vmul.f32 %v189, 0.5
    %v202 = vmul.f32 %v163, 0.5
    %v203 = vmul.f32 %v192, 0.5
    %v204 = vmul.f32 %v166, 0.5
    %v205 = vmul.f32 %v195, 0.5
    %v206 = vmul.f32 %v169, 0.5
    %v207 = vmul.f32 %v198, 0.5
    %v208 = vmul.f32 %v160, 0.70710677
    %v209 = vmul.f32 %v189, 0.70710677
    %v210 = vmul.f32 %v163, 0.70710677
    %v211 = vmul.f32 %v192, 0.70710677
    %v212 = vmul.f32 %v166, 0.70710677
    %v213 = vmul.f32 %v195, 0.70710677
    %v214 = vmul.f32 %v169, 0.70710677
    %v215 = vmul.f32 %v198, 0.70710677
    %v216 = vand.u32 2147483647, %v208
    %v217 = vand.u32 2147483647, %v209
    %v218 = vand.u32 2147483647, %v210
    %v219 = vand.u32 2147483647, %v211
    %v220 = vand.u32 2147483647, %v212
    %v221 = vand.u32 2147483647, %v213
    %v222 = vand.u32 2147483647, %v214
    %v223 = vand.u32 2147483647, %v215
    %v224 = vmul.f32 %v216, 0.3275911
    %v225 = vmul.f32 %v217, 0.3275911
    %v226 = vmul.f32 %v218, 0.3275911
    %v227 = vmul.f32 %v219, 0.3275911
    %v228 = vmul.f32 %v220, 0.3275911
    %v229 = vmul.f32 %v221, 0.3275911
    %v230 = vmul.f32 %v222, 0.3275911
    %v231 = vmul.f32 %v223, 0.3275911
    %v232 = vadd.f32 %v224, 1.0
    %v233 = vadd.f32 %v225, 1.0
    %v234 = vadd.f32 %v226, 1.0
    %v235 = vadd.f32 %v227, 1.0
    %v236 = vadd.f32 %v228, 1.0
    %v237 = vadd.f32 %v229, 1.0
    %v238 = vadd.f32 %v230, 1.0
    %v239 = vadd.f32 %v231, 1.0
    %v240 = vrcp.pop %v232
    %v241 = vmul.f32 %v232, %v240
    %v242 = vsub.f32 1.0, %v241
    %v243 = vmul.f32 %v240, %v242
    %v244 = vadd.f32 %v240, %v243
    %vm245 = vweird.f32 %v232
    %vm246 = vweird.f32 %v240
    %vm247 = vmor %vm245, %vm246
    %v248 = vsel %vm247, %v240, %v244
    %v249 = vand.u32 2147483647, %v232
    %vm250 = vcmp.eq.f32.partialorder %v249, 8.507059e+37
    %v251 = vand.u32 %v232, 2147483648
    %v252 = vor.u32 1.1754944e-38, %v251
    %v253 = vsel %vm250, %v252, %v248
    %v254 = vmul.f32 1.0, %v253
    %v255 = vrcp.pop %v233
    %v256 = vmul.f32 %v233, %v255
    %v257 = vsub.f32 1.0, %v256
    %v258 = vmul.f32 %v255, %v257
    %v259 = vadd.f32 %v255, %v258
    %vm260 = vweird.f32 %v233
    %vm261 = vweird.f32 %v255
    %vm262 = vmor %vm260, %vm261
    %v263 = vsel %vm262, %v255, %v259
    %v264 = vand.u32 2147483647, %v233
    %vm265 = vcmp.eq.f32.partialorder %v264, 8.507059e+37
    %v266 = vand.u32 %v233, 2147483648
    %v267 = vor.u32 1.1754944e-38, %v266
    %v268 = vsel %vm265, %v267, %v263
    %v269 = vmul.f32 1.0, %v268
    %v270 = vrcp.pop %v234
    %v271 = vmul.f32 %v234, %v270
    %v272 = vsub.f32 1.0, %v271
    %v273 = vmul.f32 %v270, %v272
    %v274 = vadd.f32 %v270, %v273
    %vm275 = vweird.f32 %v234
    %vm276 = vweird.f32 %v270
    %vm277 = vmor %vm275, %vm276
    %v278 = vsel %vm277, %v270, %v274
    %v279 = vand.u32 2147483647, %v234
    %vm280 = vcmp.eq.f32.partialorder %v279, 8.507059e+37
    %v281 = vand.u32 %v234, 2147483648
    %v282 = vor.u32 1.1754944e-38, %v281
    %v283 = vsel %vm280, %v282, %v278
    %v284 = vmul.f32 1.0, %v283
    %v285 = vrcp.pop %v235
    %v286 = vmul.f32 %v235, %v285
    %v287 = vsub.f32 1.0, %v286
    %v288 = vmul.f32 %v285, %v287
    %v289 = vadd.f32 %v285, %v288
    %vm290 = vweird.f32 %v235
    %vm291 = vweird.f32 %v285
    %vm292 = vmor %vm290, %vm291
    %v293 = vsel %vm292, %v285, %v289
    %v294 = vand.u32 2147483647, %v235
    %vm295 = vcmp.eq.f32.partialorder %v294, 8.507059e+37
    %v296 = vand.u32 %v235, 2147483648
    %v297 = vor.u32 1.1754944e-38, %v296
    %v298 = vsel %vm295, %v297, %v293
    %v299 = vmul.f32 1.0, %v298
    %v300 = vrcp.pop %v236
    %v301 = vmul.f32 %v236, %v300
    %v302 = vsub.f32 1.0, %v301
    %v303 = vmul.f32 %v300, %v302
    %v304 = vadd.f32 %v300, %v303
    %vm305 = vweird.f32 %v236
    %vm306 = vweird.f32 %v300
    %vm307 = vmor %vm305, %vm306
    %v308 = vsel %vm307, %v300, %v304
    %v309 = vand.u32 2147483647, %v236
    %vm310 = vcmp.eq.f32.partialorder %v309, 8.507059e+37
    %v311 = vand.u32 %v236, 2147483648
    %v312 = vor.u32 1.1754944e-38, %v311
    %v313 = vsel %vm310, %v312, %v308
    %v314 = vmul.f32 1.0, %v313
    %v315 = vrcp.pop %v237
    %v316 = vmul.f32 %v237, %v315
    %v317 = vsub.f32 1.0, %v316
    %v318 = vmul.f32 %v315, %v317
    %v319 = vadd.f32 %v315, %v318
    %vm320 = vweird.f32 %v237
    %vm321 = vweird.f32 %v315
    %vm322 = vmor %vm320, %vm321
    %v323 = vsel %vm322, %v315, %v319
    %v324 = vand.u32 2147483647, %v237
    %vm325 = vcmp.eq.f32.partialorder %v324, 8.507059e+37
    %v326 = vand.u32 %v237, 2147483648
    %v327 = vor.u32 1.1754944e-38, %v326
    %v328 = vsel %vm325, %v327, %v323
    %v329 = vmul.f32 1.0, %v328
    %v330 = vrcp.pop %v238
    %v331 = vmul.f32 %v238, %v330
    %v332 = vsub.f32 1.0, %v331
    %v333 = vmul.f32 %v330, %v332
    %v334 = vadd.f32 %v330, %v333
    %vm335 = vweird.f32 %v238
    %vm336 = vweird.f32 %v330
    %vm337 = vmor %vm335, %vm336
    %v338 = vsel %vm337, %v330, %v334
    %v339 = vand.u32 2147483647, %v238
    %vm340 = vcmp.eq.f32.partialorder %v339, 8.507059e+37
    %v341 = vand.u32 %v238, 2147483648
    %v342 = vor.u32 1.1754944e-38, %v341
    %v343 = vsel %vm340, %v342, %v338
    %v344 = vmul.f32 1.0, %v343
    %v345 = vrcp.pop %v239
    %v346 = vmul.f32 %v239, %v345
    %v347 = vsub.f32 1.0, %v346
    %v348 = vmul.f32 %v345, %v347
    %v349 = vadd.f32 %v345, %v348
    %vm350 = vweird.f32 %v239
    %vm351 = vweird.f32 %v345
    %vm352 = vmor %vm350, %vm351
    %v353 = vsel %vm352, %v345, %v349
    %v354 = vand.u32 2147483647, %v239
    %vm355 = vcmp.eq.f32.partialorder %v354, 8.507059e+37
    %v356 = vand.u32 %v239, 2147483648
    %v357 = vor.u32 1.1754944e-38, %v356
    %v358 = vsel %vm355, %v357, %v353
    %v359 = vmul.f32 1.0, %v358
    %v360 = vmul.f32 %v254, 1.0614054
    %v361 = vmul.f32 %v269, 1.0614054
    %v362 = vmul.f32 %v284, 1.0614054
    %v363 = vmul.f32 %v299, 1.0614054
    %v364 = vmul.f32 %v314, 1.0614054
    %v365 = vmul.f32 %v329, 1.0614054
    %v366 = vmul.f32 %v344, 1.0614054
    %v367 = vmul.f32 %v359, 1.0614054
    %v368 = vadd.f32 %v360, -1.4531521
    %v369 = vadd.f32 %v361, -1.4531521
    %v370 = vadd.f32 %v362, -1.4531521
    %v371 = vadd.f32 %v363, -1.4531521
    %v372 = vadd.f32 %v364, -1.4531521
    %v373 = vadd.f32 %v365, -1.4531521
    %v374 = vadd.f32 %v366, -1.4531521
    %v375 = vadd.f32 %v367, -1.4531521
    %v376 = vmul.f32 %v368, %v254
    %v377 = vmul.f32 %v369, %v269
    %v378 = vmul.f32 %v370, %v284
    %v379 = vmul.f32 %v371, %v299
    %v380 = vmul.f32 %v372, %v314
    %v381 = vmul.f32 %v373, %v329
    %v382 = vmul.f32 %v374, %v344
    %v383 = vmul.f32 %v375, %v359
    %v384 = vadd.f32 %v376, 1.4214138
    %v385 = vadd.f32 %v377, 1.4214138
    %v386 = vadd.f32 %v378, 1.4214138
    %v387 = vadd.f32 %v379, 1.4214138
    %v388 = vadd.f32 %v380, 1.4214138
    %v389 = vadd.f32 %v381, 1.4214138
    %v390 = vadd.f32 %v382, 1.4214138
    %v391 = vadd.f32 %v383, 1.4214138
    %v392 = vmul.f32 %v384, %v254
    %v393 = vmul.f32 %v385, %v269
    %v394 = vmul.f32 %v386, %v284
    %v395 = vmul.f32 %v387, %v299
    %v396 = vmul.f32 %v388, %v314
    %v397 = vmul.f32 %v389, %v329
    %v398 = vmul.f32 %v390, %v344
    %v399 = vmul.f32 %v391, %v359
    %v400 = vadd.f32 %v392, -0.28449672
    %v401 = vadd.f32 %v393, -0.28449672
    %v402 = vadd.f32 %v394, -0.28449672
    %v403 = vadd.f32 %v395, -0.28449672
    %v404 = vadd.f32 %v396, -0.28449672
    %v405 = vadd.f32 %v397, -0.28449672
    %v406 = vadd.f32 %v398, -0.28449672
    %v407 = vadd.f32 %v399, -0.28449672
    %v408 = vmul.f32 %v400, %v254
    %v409 = vmul.f32 %v401, %v269
    %v410 = vmul.f32 %v402, %v284
    %v411 = vmul.f32 %v403, %v299
    %v412 = vmul.f32 %v404, %v314
    %v413 = vmul.f32 %v405, %v329
    %v414 = vmul.f32 %v406, %v344
    %v415 = vmul.f32 %v407, %v359
    %v416 = vadd.f32 %v408, 0.2548296
    %v417 = vadd.f32 %v409, 0.2548296
    %v418 = vadd.f32 %v410, 0.2548296
    %v419 = vadd.f32 %v411, 0.2548296
    %v420 = vadd.f32 %v412, 0.2548296
    %v421 = vadd.f32 %v413, 0.2548296
    %v422 = vadd.f32 %v414, 0.2548296
    %v423 = vadd.f32 %v415, 0.2548296
    %v424 = vmul.f32 %v416, %v254
    %v425 = vmul.f32 %v417, %v269
    %v426 = vmul.f32 %v418, %v284
    %v427 = vmul.f32 %v419, %v299
    %v428 = vmul.f32 %v420, %v314
    %v429 = vmul.f32 %v421, %v329
    %v430 = vmul.f32 %v422, %v344
    %v431 = vmul.f32 %v423, %v359
    %v432 = vsub.f32 0.0, %v216
    %v433 = vsub.f32 0.0, %v217
    %v434 = vsub.f32 0.0, %v218
    %v435 = vsub.f32 0.0, %v219
    %v436 = vsub.f32 0.0, %v220
    %v437 = vsub.f32 0.0, %v221
    %v438 = vsub.f32 0.0, %v222
    %v439 = vsub.f32 0.0, %v223
    %v440 = vmul.f32 %v432, %v216
    %v441 = vmul.f32 %v433, %v217
    %v442 = vmul.f32 %v434, %v218
    %v443 = vmul.f32 %v435, %v219
    %v444 = vmul.f32 %v436, %v220
    %v445 = vmul.f32 %v437, %v221
    %v446 = vmul.f32 %v438, %v222
    %v447 = vmul.f32 %v439, %v223
    %v448 = vmul.f32 %v440, 1.442695
    %v449 = vpow.pop %v448
    %v450 = vmul.f32 %v441, 1.442695
    %v451 = vpow.pop %v450
    %v452 = vmul.f32 %v442, 1.442695
    %v453 = vpow.pop %v452
    %v454 = vmul.f32 %v443, 1.442695
    %v455 = vpow.pop %v454
    %v456 = vmul.f32 %v444, 1.442695
    %v457 = vpow.pop %v456
    %v458 = vmul.f32 %v445, 1.442695
    %v459 = vpow.pop %v458
    %v460 = vmul.f32 %v446, 1.442695
    %v461 = vpow.pop %v460
    %v462 = vmul.f32 %v447, 1.442695
    %v463 = vpow.pop %v462
    %v464 = vmul.f32 %v424, %v449
    %v465 = vmul.f32 %v425, %v451
    %v466 = vmul.f32 %v426, %v453
    %v467 = vmul.f32 %v427, %v455
    %v468 = vmul.f32 %v428, %v457
    %v469 = vmul.f32 %v429, %v459
    %v470 = vmul.f32 %v430, %v461
    %v471 = vmul.f32 %v431, %v463
    %v472 = vsub.f32 1.0, %v464
    %v473 = vsub.f32 1.0, %v465
    %v474 = vsub.f32 1.0, %v466
    %v475 = vsub.f32 1.0, %v467
    %v476 = vsub.f32 1.0, %v468
    %v477 = vsub.f32 1.0, %v469
    %v478 = vsub.f32 1.0, %v470
    %v479 = vsub.f32 1.0, %v471
    %vm480 = vcmp.ge.f32.partialorder %v208, 0.0
    %vm481 = vcmp.ge.f32.partialorder %v209, 0.0
    %vm482 = vcmp.ge.f32.partialorder %v210, 0.0
    %vm483 = vcmp.ge.f32.partialorder %v211, 0.0
    %vm484 = vcmp.ge.f32.partialorder %v212, 0.0
    %vm485 = vcmp.ge.f32.partialorder %v213, 0.0
    %vm486 = vcmp.ge.f32.partialorder %v214, 0.0
    %vm487 = vcmp.ge.f32.partialorder %v215, 0.0
    %v488 = vsub.f32 0.0, %v472
    %v489 = vsub.f32 0.0, %v473
    %v490 = vsub.f32 0.0, %v474
    %v491 = vsub.f32 0.0, %v475
    %v492 = vsub.f32 0.0, %v476
    %v493 = vsub.f32 0.0, %v477
    %v494 = vsub.f32 0.0, %v478
    %v495 = vsub.f32 0.0, %v479
    %v496 = vsel %vm480, %v472, %v488
    %v497 = vsel %vm481, %v473, %v489
    %v498 = vsel %vm482, %v474, %v490
    %v499 = vsel %vm483, %v475, %v491
    %v500 = vsel %vm484, %v476, %v492
    %v501 = vsel %vm485, %v477, %v493
    %v502 = vsel %vm486, %v478, %v494
    %v503 = vsel %vm487, %v479, %v495
    %v504 = vadd.f32 %v496, 1.0
    %v505 = vadd.f32 %v497, 1.0
    %v506 = vadd.f32 %v498, 1.0
    %v507 = vadd.f32 %v499, 1.0
    %v508 = vadd.f32 %v500, 1.0
    %v509 = vadd.f32 %v501, 1.0
    %v510 = vadd.f32 %v502, 1.0
    %v511 = vadd.f32 %v503, 1.0
    %v512 = vmul.f32 %v200, %v504
    %v513 = vmul.f32 %v201, %v505
    %v514 = vmul.f32 %v202, %v506
    %v515 = vmul.f32 %v203, %v507
    %v516 = vmul.f32 %v204, %v508
    %v517 = vmul.f32 %v205, %v509
    %v518 = vmul.f32 %v206, %v510
    %v519 = vmul.f32 %v207, %v511
    %v520 = vld [vmem:[%s4] sm:$0x1]
    %v522 = vperm.slane %v520, 0
    %524 = vmatpush.msra.mxu0 %v119
    %525 = vmatpush.msra.mxu0 %v118
    %526 = vmatpush.msra.mxu0 %v117
    %527 = vmatpush.msra.mxu0 %v116
    %528 = vmatpush.msra.mxu0 %v115
    %529 = vmatpush.msra.mxu0 %v114
    %530 = vmatpush.msra.mxu0 %v113
    %531 = vmatpush.msra.mxu0 %v112
    %532 = vmatpush.msra.mxu0 %v111
    %533 = vmatpush.msra.mxu0 %v110
    %534 = vmatpush.msra.mxu0 %v109
    %535 = vmatpush.msra.mxu0 %v108
    %536 = vmatpush.msra.mxu0 %v107
    %537 = vmatpush.msra.mxu0 %v106
    %538 = vmatpush.msra.mxu0 %v105
    %539 = vmatpush.msra.mxu0 %v104
    %540 = vmatmul.f32.gmra.mxu0 %v512
    %v541 = vpop.f32.mrf.mxu0
    %v542 = vadd.f32 %v522, %v541
    %543 = vmatmul.f32.gmra.mxu0 %v514
    %v544 = vpop.f32.mrf.mxu0
    %v545 = vadd.f32 %v522, %v544
    %546 = vmatmul.f32.gmra.mxu0 %v516
    %v547 = vpop.f32.mrf.mxu0
    %v548 = vadd.f32 %v522, %v547
    %549 = vmatmul.f32.gmra.mxu0 %v518
    %v550 = vpop.f32.mrf.mxu0
    %v551 = vadd.f32 %v522, %v550
    %552 = vdwg.mxu0
    %553 = vmatpush.msra.mxu0 %v135
    %554 = vmatpush.msra.mxu0 %v134
    %555 = vmatpush.msra.mxu0 %v133
    %556 = vmatpush.msra.mxu0 %v132
    %557 = vmatpush.msra.mxu0 %v131
    %558 = vmatpush.msra.mxu0 %v130
    %559 = vmatpush.msra.mxu0 %v129
    %560 = vmatpush.msra.mxu0 %v128
    %561 = vmatpush.msra.mxu0 %v127
    %562 = vmatpush.msra.mxu0 %v126
    %563 = vmatpush.msra.mxu0 %v125
    %564 = vmatpush.msra.mxu0 %v124
    %565 = vmatpush.msra.mxu0 %v123
    %566 = vmatpush.msra.mxu0 %v122
    %567 = vmatpush.msra.mxu0 %v121
    %568 = vmatpush.msra.mxu0 %v120
    %569 = vmatmul.f32.gmra.mxu0 %v513
    %v570 = vpop.f32.mrf.mxu0
    %v571 = vadd.f32 %v542, %v570
    %572 = vmatmul.f32.gmra.mxu0 %v515
    %v573 = vpop.f32.mrf.mxu0
    %v574 = vadd.f32 %v545, %v573
    %575 = vmatmul.f32.gmra.mxu0 %v517
    %v576 = vpop.f32.mrf.mxu0
    %v577 = vadd.f32 %v548, %v576
    %578 = vmatmul.f32.gmra.mxu0 %v519
    %v579 = vpop.f32.mrf.mxu0
    %v580 = vadd.f32 %v551, %v579
    %581 = vdwg.mxu0
    %582 = vst [vmem:[#allocation8] sm:$0xff] %v571
    %583 = vst [vmem:[#allocation8 + $0x8] sm:$0xff] %v574
    %584 = vst [vmem:[#allocation8 + $0x10] sm:$0xff] %v577
    %585 = vst [vmem:[#allocation8 + $0x18] sm:$0xff] %v580
    // Predicated region
    $region34: #{feedforward.1} parent=1 // pred_check
      _
    $region35: #{feedforward.1} parent=1 // pred_check_branch
      %587 = sbr.rel (0) target = $region37
    $region36: #{feedforward.1} parent=1 // pred_region
      %589 = vsyncadd [#allocation4], 0
      %s590 = sshll.u32 [#allocation8], 4
      %s591 = int_to_ptr.vmem [resolvable:$true] %s590
      %s592 = sshll.u32 %s5, 4
      %s593 = int_to_ptr.hbm [resolvable:$true] %s592
      %598 = dma.vmem_to_hbm [thread:$0]  %s591, 512, %s593, [#allocation4], 128, 128, 8
    $region37: #{feedforward.1} parent=1 // pred_fallthru
      _
    // Predicated region
    $region38: #{feedforward.1} parent=1 // pred_check
      _
    $region39: #{feedforward.1} parent=1 // pred_check_branch
      %600 = sbr.rel (0) target = $region41
    $region40: #{feedforward.1} parent=1 // pred_region
      %602 = dma.done [#allocation4], 512
    $region41: #{feedforward.1} parent=1 // pred_fallthru
      _
    %603 = vsyncpa [#allocation3], 1
    %604 = vsyncpa [#allocation6], 1
    %605 = vsyncpa [#allocation4], 1

</llo_original>
